<compile_context>
chip_gen: v7x
topology: tpu7x:2x2x1
jax: 0.10.0
libtpu: 0.0.40
codegen_flags: <defaults>
</compile_context>

<pallas_src>
import functools

import jax
import jax.numpy as jnp
from jax.experimental import pallas as pl
from jax.experimental.pallas import tpu as pltpu


# ----------------------------- kernels ------------------------------------- #

def _ext_labeller_kernel(x_ref, w_ref, b_ref, o_ref, *, chunk, use_mxu):
    """Generic path (H >= 128, or small-H packing not applicable).

    x_ref: (TILE_R, H) VMEM, input dtype
    w_ref: (1, H)  (VPU path)  or  (H, 1)  (MXU path), resident across grid steps
    b_ref: (1, 1) SMEM f32 bias
    o_ref: (TILE_R, 1) VMEM output block
    """
    if use_mxu:
        # bf16 on v5e: no native bf16 VPU -> MXU dot (f32 accumulation, no big temp).
        logits = jnp.dot(x_ref[...], w_ref[...], preferred_element_type=jnp.float32)
    else:
        h = x_ref.shape[-1]
        acc = jnp.zeros((x_ref.shape[0], 1), jnp.float32)
        # Statically unrolled chunking over the lane (H) axis bounds the live
        # product intermediate to (TILE_R, chunk) instead of (TILE_R, H).
        for c0 in range(0, h, chunk):
            c1 = min(c0 + chunk, h)
            acc = acc + jnp.sum(
                x_ref[:, c0:c1] * w_ref[:, c0:c1],
                axis=-1, keepdims=True, dtype=jnp.float32)
        logits = acc
    y = jax.nn.sigmoid(logits + b_ref[0, 0])
    o_ref[...] = y.astype(o_ref.dtype)


def _ext_labeller_packed_kernel(x_ref, w_ref, b_ref, o_ref, *, k, hidden):
    """Small-H path: k original rows packed into the 128-wide lane dimension.

    x_ref: (TILE_RP, k*hidden) VMEM (k original rows per packed row)
    w_ref: (1, k*hidden) VMEM (weight row tiled k times)
    b_ref: (1, 1) SMEM f32 bias
    o_ref: (TILE_RP, k) VMEM; o[p, g] is the label for original row p*k + g
    """
    prod = x_ref[...] * w_ref[...]                       # VPU, full 128-lane width
    cols = []
    for g in range(k):                                   # per-group lane reductions
        cols.append(jnp.sum(prod[:, g * hidden:(g + 1) * hidden],
                            axis=-1, keepdims=True, dtype=jnp.float32))
    logits = jnp.concatenate(cols, axis=-1) if k > 1 else cols[0]
    y = jax.nn.sigmoid(logits + b_ref[0, 0])
    o_ref[...] = y.astype(o_ref.dtype)


# --------------------------- tiling helpers --------------------------------- #

def _round_up(x, m):
    return ((x + m - 1) // m) * m


def _tpu_generation_and_vmem():
    """Best-effort (generation, per-core VMEM bytes). Never raises."""
    vmem = None
    gen = None
    try:
        info = pltpu.get_tpu_info()
        vmem = getattr(info, "vmem_capacity_bytes", None)
    except Exception:
        pass
    try:
        kind = jax.devices()[0].device_kind.lower()
        for g in (7, 6, 5, 4):
            if "v%d" % g in kind:
                gen = g
                break
    except Exception:
        pass
    if vmem is None:
        vmem = (64 << 20) if (gen is not None and gen >= 7) else (128 << 20)
    return gen, vmem


def _pick_tile_rows(rows, row_bytes, gen, vmem_cap):
    """Largest row tile (multiple of 128, <= 8192) fitting the per-buffer budget."""
    is_v7x = gen is not None and gen >= 7
    budget = vmem_cap // (4 if is_v7x else 8)     # x is double-buffered
    tile = budget // max(row_bytes, 1)
    tile = max(128, min(tile, 8192))
    tile = (tile // 128) * 128
    tile = min(tile, _round_up(rows, 128))        # don't grossly exceed the row count
    if is_v7x and rows >= 256:
        # Keep >= 2 grid steps so the "parallel" row axis splits over both TCs.
        tile = min(tile, _round_up(-(-rows // 2), 128))
    return max(tile, 128)


# ------------------------------ wrapper ------------------------------------- #

def ext_labeller_forward(utt_output, weight, bias):
    """utt_output: (..., H); weight: (H, 1); bias: scalar array ()."""
    orig_shape = utt_output.shape
    hidden = orig_shape[-1]
    x2d = utt_output.reshape(-1, hidden)
    rows = x2d.shape[0]
    dt = x2d.dtype
    itemsize = jnp.dtype(dt).itemsize
    gen, vmem_cap = _tpu_generation_and_vmem()

    w_row = weight.reshape(1, hidden).astype(dt)
    b2d = bias.reshape(1, 1).astype(jnp.float32)

    # Small-H lane packing: fold k rows into the 128-wide lane dimension.
    k = 1
    if hidden < 128:
        k_max = min(128 // hidden, 16)
        for cand in range(k_max, 1, -1):
            if rows % cand == 0:
                k = cand
                break
        # TODO(synk): when no k>1 divides `rows`, handle the tail rows separately
        # instead of falling back to the lane-sparse generic path.

    if k > 1:
        rows_p = rows // k
        hp = k * hidden
        x_in = x2d.reshape(rows_p, hp)                 # free row-major collapse, no copy
        w_in = jnp.tile(w_row, (1, k))                 # (1, k*H)
        row_bytes = hp * itemsize
        tile_r = _pick_tile_rows(rows_p, row_bytes, gen, vmem_cap)
        if rows_p <= tile_r:
            tile_r = rows_p                            # single full block, no overhang
        num_tiles = pl.cdiv(rows_p, tile_r)
        kernel = functools.partial(_ext_labeller_packed_kernel, k=k, hidden=hidden)
        out_shape = jax.ShapeDtypeStruct((rows_p, k), dt)
        in_specs = [
            pl.BlockSpec((tile_r, hp), lambda i: (i, 0)),
            pl.BlockSpec((1, hp), lambda i: (0, 0)),
            pl.BlockSpec(memory_space=pltpu.SMEM),
        ]
        out_specs = pl.BlockSpec((tile_r, k), lambda i: (i, 0))
        temp_bytes = tile_r * hp * 4
    else:
        use_mxu = (dt == jnp.bfloat16 and gen is not None and gen <= 5)
        x_in = x2d
        w_in = weight.reshape(hidden, 1).astype(dt) if use_mxu else w_row
        row_bytes = hidden * itemsize
        tile_r = _pick_tile_rows(rows, row_bytes, gen, vmem_cap)
        if rows <= tile_r:
            tile_r = rows                              # single full block, no overhang
        num_tiles = pl.cdiv(rows, tile_r)
        chunk = 512 if hidden > 512 else hidden
        kernel = functools.partial(_ext_labeller_kernel, chunk=chunk, use_mxu=use_mxu)
        out_shape = jax.ShapeDtypeStruct((rows, 1), dt)
        in_specs = [
            pl.BlockSpec((tile_r, hidden), lambda i: (i, 0)),
            pl.BlockSpec(w_in.shape, lambda i: (0, 0)),
            pl.BlockSpec(memory_space=pltpu.SMEM),
        ]
        out_specs = pl.BlockSpec((tile_r, 1), lambda i: (i, 0))
        temp_bytes = tile_r * chunk * 4

    tile_bytes = tile_r * row_bytes
    cap = (56 << 20) if (gen is not None and gen >= 7) else (100 << 20)
    vmem_limit = int(min(max(2 * tile_bytes + temp_bytes + (4 << 20), 32 << 20), cap))

    cost = pl.CostEstimate(
        flops=2 * rows * hidden,
        transcendentals=rows,
        bytes_accessed=(x_in.size * itemsize + w_in.size * itemsize + rows * itemsize),
    )

    out = pl.pallas_call(
        kernel,
        grid=(num_tiles,),
        out_shape=out_shape,
        in_specs=in_specs,
        out_specs=out_specs,
        compiler_params=pltpu.CompilerParams(
            dimension_semantics=("parallel",),
            vmem_limit_bytes=vmem_limit,
        ),
        cost_estimate=cost,
    )(x_in, w_in, b2d)

    # Packed path: out[p, g] is row p*k+g; row-major reshape restores original order.
    return out.reshape(*orig_shape[:-1], 1)


def init_ext_labeller_params(rnn_hidden_size, key):
    """nn.Linear(rnn_hidden_size, 1) shapes: weight stored as (H, 1), bias scalar."""
    kw, kb = jax.random.split(key)
    bound = 1.0 / jnp.sqrt(jnp.float32(rnn_hidden_size))
    weight = jax.random.uniform(kw, (rnn_hidden_size, 1),
                                dtype=jnp.float32, minval=-bound, maxval=bound)
    bias = jax.random.uniform(kb, (), dtype=jnp.float32,
                              minval=-bound, maxval=bound)
    return weight, bias


if __name__ == "__main__":
    key = jax.random.PRNGKey(0)
    k_x, k_p = jax.random.split(key)

    batch, seq, hidden = 2, 8, 32
    utt_output = jax.random.normal(k_x, (batch, seq, hidden), dtype=jnp.float32)
    weight, bias = init_ext_labeller_params(hidden, k_p)

    out = ext_labeller_forward(utt_output, weight, bias)
    out = jax.block_until_ready(out)

    # reference check (plain JAX)
    ref = jax.nn.sigmoid(utt_output @ weight + bias)
    assert out.shape == (batch, seq, 1)
    assert jnp.allclose(out, ref, atol=1e-5, rtol=1e-5)

    print("KERNEL_OK")
</pallas_src>

<mosaic_0001>
module attributes {stable_mosaic.version = 11 : i64} {
  func.func @_ext_labeller_packed_kernel(%arg0: i32, %arg1: memref<4x128xf32, #tpu.memory_space<vmem>>, %arg2: memref<1x128xf32, #tpu.memory_space<vmem>>, %arg3: memref<1x1xf32, #tpu.memory_space<smem>>, %arg4: memref<4x4xf32, #tpu.memory_space<vmem>>) attributes {dimension_semantics = [#tpu.dimension_semantics<parallel>], iteration_bounds = array<i64: 1>, scalar_prefetch = 0 : i64, scratch_operands = 0 : i64, tpu.core_type = #tpu.core_type<tc>, window_params = [{transform_indices = @transform_0, window_bounds = array<i64: 4, 128>}, {pipeline_mode = #tpu.pipeline_mode<synchronous>, transform_indices = @transform_1, window_bounds = array<i64: 1, 128>}, {transform_indices = @transform_2, window_bounds = array<i64: 1, 1>}, {transform_indices = @transform_3, window_bounds = array<i64: 4, 4>}]} {
    %c0 = arith.constant 0 : index
    %c0_0 = arith.constant 0 : index
    %0 = vector.load %arg1[%c0, %c0_0] : memref<4x128xf32, #tpu.memory_space<vmem>>, vector<4x128xf32>
    %c0_1 = arith.constant 0 : index
    %c0_2 = arith.constant 0 : index
    %1 = vector.load %arg2[%c0_1, %c0_2] : memref<1x128xf32, #tpu.memory_space<vmem>>, vector<1x128xf32>
    %2 = vector.broadcast %1 : vector<1x128xf32> to vector<4x128xf32>
    %3 = arith.mulf %0, %2 : vector<4x128xf32>
    %4 = vector.extract_strided_slice %3 {offsets = [0, 0], sizes = [4, 32], strides = [1, 1]} : vector<4x128xf32> to vector<4x32xf32>
    %cst = arith.constant dense<0.000000e+00> : vector<4xf32>
    %5 = vector.multi_reduction <add>, %4, %cst [1] : vector<4x32xf32> to vector<4xf32>
    %6 = vector.shape_cast %5 : vector<4xf32> to vector<4x1xf32>
    %7 = vector.extract_strided_slice %3 {offsets = [0, 32], sizes = [4, 32], strides = [1, 1]} : vector<4x128xf32> to vector<4x32xf32>
    %cst_3 = arith.constant dense<0.000000e+00> : vector<4xf32>
    %8 = vector.multi_reduction <add>, %7, %cst_3 [1] : vector<4x32xf32> to vector<4xf32>
    %9 = vector.shape_cast %8 : vector<4xf32> to vector<4x1xf32>
    %10 = vector.extract_strided_slice %3 {offsets = [0, 64], sizes = [4, 32], strides = [1, 1]} : vector<4x128xf32> to vector<4x32xf32>
    %cst_4 = arith.constant dense<0.000000e+00> : vector<4xf32>
    %11 = vector.multi_reduction <add>, %10, %cst_4 [1] : vector<4x32xf32> to vector<4xf32>
    %12 = vector.shape_cast %11 : vector<4xf32> to vector<4x1xf32>
    %13 = vector.extract_strided_slice %3 {offsets = [0, 96], sizes = [4, 32], strides = [1, 1]} : vector<4x128xf32> to vector<4x32xf32>
    %cst_5 = arith.constant dense<0.000000e+00> : vector<4xf32>
    %14 = vector.multi_reduction <add>, %13, %cst_5 [1] : vector<4x32xf32> to vector<4xf32>
    %15 = vector.shape_cast %14 : vector<4xf32> to vector<4x1xf32>
    %16 = tpu.concatenate %6, %9, %12, %15 in 1 : vector<4x1xf32>, vector<4x1xf32>, vector<4x1xf32>, vector<4x1xf32> -> vector<4x4xf32>
    %c0_6 = arith.constant 0 : index
    %c0_7 = arith.constant 0 : index
    %17 = memref.load %arg3[%c0_6, %c0_7] : memref<1x1xf32, #tpu.memory_space<smem>>
    %18 = vector.broadcast %17 : f32 to vector<4x4xf32>
    %19 = arith.addf %16, %18 : vector<4x4xf32>
    %20 = arith.negf %19 : vector<4x4xf32>
    %21 = math.exp %20 : vector<4x4xf32>
    %cst_8 = arith.constant 1.000000e+00 : f32
    %22 = vector.broadcast %cst_8 : f32 to vector<4x4xf32>
    %23 = arith.addf %22, %21 : vector<4x4xf32>
    %24 = arith.divf %22, %23 : vector<4x4xf32>
    %c0_9 = arith.constant 0 : index
    %c0_10 = arith.constant 0 : index
    %25 = vector.load %arg4[%c0_9, %c0_10] : memref<4x4xf32, #tpu.memory_space<vmem>>, vector<4x4xf32>
    tpu.vector_store %arg4[%c0_9, %c0_10], %24 {strides = array<i32>} : memref<4x4xf32, #tpu.memory_space<vmem>>, vector<4x4xf32>,
    return
  }
  func.func @transform_0(%arg0: i32) -> (i32, i32) {
    %c0_i32 = arith.constant 0 : i32
    %c0_i32_0 = arith.constant 0 : i32
    return %arg0, %c0_i32 : i32, i32
  }
  func.func @transform_1(%arg0: i32) -> (i32, i32) {
    %c0_i32 = arith.constant 0 : i32
    %c0_i32_0 = arith.constant 0 : i32
    %c0_i32_1 = arith.constant 0 : i32
    return %c0_i32, %c0_i32_0 : i32, i32
  }
  func.func @transform_2(%arg0: i32) -> (i32, i32) {
    %c0_i32 = arith.constant 0 : i32
    %c0_i32_0 = arith.constant 0 : i32
    %c0_i32_1 = arith.constant 0 : i32
    return %c0_i32, %c0_i32_0 : i32, i32
  }
  func.func @transform_3(%arg0: i32) -> (i32, i32) {
    %c0_i32 = arith.constant 0 : i32
    %c0_i32_0 = arith.constant 0 : i32
    return %arg0, %c0_i32 : i32, i32
  }
}

</mosaic_0001>

<llo_original>
// kernel: tpu_custom_call.1
$region0: #{tpu_custom_call.1}
  #allocation0 [shape = 'u32[]', space=smem, size = 0x4, offset = 0x4, fixed_abs, tag = 'smem constant byte address 0x4 - core index']
  #allocation1 [shape = 'u32[144,128]{1,0:T(1,128)}', space=vmem, size = 0x12000, scoped, tag = 'internal scratch']
  #allocation2 [shape = 'f32[1,1]{1,0:T(1,128)S(6)}', space=smem, size = 0x200, scoped, tag = 'scoped memory for tpu_custom_call.1']
  %s0 = inlined_call_operand.hbm [shape: f32[4,128], index: 0, kind: input, shape index: {}]
  %s1 = inlined_call_operand.vmem [shape: f32[1,128], index: 1, kind: input, shape index: {}]
  %s2 = inlined_call_operand.<no memory space> [shape: f32[1,1], index: 2, kind: input, shape index: {}]
  %s3 = inlined_call_operand.hbm [shape: f32[4,4], index: 3, kind: output, shape index: {}]
  %s4 = sld [smem:[#allocation0]]
  $region26: #{tpu_custom_call.1} parent=0
    _
  %s6 = ssub.s32 1, %s4
  %s7 = scalar_select 0, %s6, %s4
  %8 = sst [smem:[#allocation2]] %s2
  $region1: #{tpu_custom_call.1} parent=0
    #allocation3 [shape = 'u8[2048]{0}', space=vmem, size = 0x800, scoped, tag = 'input window, operand 0, single buffered']
    #allocation4 [shape = 's32[1]{0}', space=sflag, size = 0x4, scoped, tag = 'scoped memory for tpu_custom_call.1']
    #allocation5 [shape = 's32[1]{0}', space=sflag, size = 0x4, scoped, tag = 'scoped memory for tpu_custom_call.1']
    #allocation6 [shape = 'u8[2048]{0}', space=vmem, size = 0x800, scoped, tag = 'output window, operand 0, single buffered']
    %9 = vsyncpa [#allocation4], 0
    %10 = vsyncpa [#allocation5], 0
    // Predicated region
    $region2: #{tpu_custom_call.1} parent=1 // pred_check
      _
    $region3: #{tpu_custom_call.1} parent=1 // pred_check_branch
      %12 = sbr.rel (0) target = $region5
    $region4: #{tpu_custom_call.1} parent=1 // pred_region
      %s14 = ssub.s32 64, 64
      %15 = vsyncadd [#allocation4], %s14
      %s17 = sshll.u32 [#allocation3], 4
      %s18 = int_to_ptr.vmem [resolvable:$true] %s17
      %20 = dma.hbm_to_vmem [thread:$0]  %s0, 64, %s18, [#allocation4]
    $region5: #{tpu_custom_call.1} parent=1 // pred_fallthru
      _
    // Predicated region
    $region6: #{tpu_custom_call.1} parent=1 // pred_check
      _
    $region7: #{tpu_custom_call.1} parent=1 // pred_check_branch
      %22 = sbr.rel (0) target = $region9
    $region8: #{tpu_custom_call.1} parent=1 // pred_region
      _
    $region9: #{tpu_custom_call.1} parent=1 // pred_fallthru
      _
    // Predicated region
    $region10: #{tpu_custom_call.1} parent=1 // pred_check
      _
    $region11: #{tpu_custom_call.1} parent=1 // pred_check_branch
      %24 = sbr.rel (0) target = $region13
    $region12: #{tpu_custom_call.1} parent=1 // pred_region
      _
    $region13: #{tpu_custom_call.1} parent=1 // pred_fallthru
      _
    // Predicated region
    $region14: #{tpu_custom_call.1} parent=1 // pred_check
      _
    $region15: #{tpu_custom_call.1} parent=1 // pred_check_branch
      %26 = sbr.rel (0) target = $region17
    $region16: #{tpu_custom_call.1} parent=1 // pred_region
      %27 = dma.done [#allocation4], 64
    $region17: #{tpu_custom_call.1} parent=1 // pred_fallthru
      _
    %v28 = vld [vmem:[#allocation3] sm:$0xf]
    %v29 = vld [vmem:[%s1] sm:$0x1]
    %v31 = vlaneseq
    %v32 = vshrl.u32 %v31, 7
    %v33 = vsub.s32 0, %v32
    %v34 = vrot.slane %v29, %v33
    %v36 = vmul.f32 %v28, %v34
    %vm37 = vcmask 257024
    %v38 = vsel %vm37, %v36, 0.0
    %39 = vadd.xlane.f32.xlu0 %v38
    %v40 = vpop.xlane.xlu0 %39
    %42 = vrot.lane.b32.xlu0 %v36, 96
    %v43 = vpop.permute.xlu0 %42
    %v45 = vsel %vm37, %v43, 0.0
    %46 = vadd.xlane.f32.xlu0 %v45
    %v47 = vpop.xlane.xlu0 %46
    %48 = vrot.lane.b32.xlu0 %v36, 64
    %v49 = vpop.permute.xlu0 %48
    %v51 = vsel %vm37, %v49, 0.0
    %52 = vadd.xlane.f32.xlu0 %v51
    %v53 = vpop.xlane.xlu0 %52
    %54 = vrot.lane.b32.xlu0 %v36, 32
    %v55 = vpop.permute.xlu0 %54
    %v57 = vsel %vm37, %v55, 0.0
    %58 = vadd.xlane.f32.xlu0 %v57
    %v59 = vpop.xlane.xlu0 %58
    %vm60 = vcmask 7168
    %v61 = vsel %vm60, %v40, %v47
    %vm62 = vcmask 15360
    %v63 = vsel %vm62, %v61, %v53
    %vm64 = vcmask 23552
    %v65 = vsel %vm64, %v63, %v59
    %s66 = sld [smem:[#allocation2]]
    %v67 = vstv %s66
    %v68 = vadd.f32 %v65, %v67
    %v69 = vxor.u32 %v68, 2147483648
    %v70 = vmul.f32 %v69, 1.442695
    %v71 = vpow.pop %v70
    %v72 = vadd.f32 %v71, 1.0
    %v73 = vrcp.pop %v72
    %v74 = vmul.f32 1.0, %v73
    %vm75 = vcmask 27648
    %76 = vst.msk [vmem:[#allocation6] sm:$0xf] %vm75, %v74
    // Predicated region
    $region18: #{tpu_custom_call.1} parent=1 // pred_check
      _
    $region19: #{tpu_custom_call.1} parent=1 // pred_check_branch
      %78 = sbr.rel (0) target = $region21
    $region20: #{tpu_custom_call.1} parent=1 // pred_region
      %s80 = ssub.s32 64, 64
      %81 = vsyncadd [#allocation5], %s80
      %s83 = sshll.u32 [#allocation6], 4
      %s84 = int_to_ptr.vmem [resolvable:$true] %s83
      %86 = dma.vmem_to_hbm [thread:$0]  %s84, 64, %s3, [#allocation5]
    $region21: #{tpu_custom_call.1} parent=1 // pred_fallthru
      _
    // Predicated region
    $region22: #{tpu_custom_call.1} parent=1 // pred_check
      _
    $region23: #{tpu_custom_call.1} parent=1 // pred_check_branch
      %88 = sbr.rel (0) target = $region25
    $region24: #{tpu_custom_call.1} parent=1 // pred_region
      %89 = dma.done [#allocation5], 64
    $region25: #{tpu_custom_call.1} parent=1 // pred_fallthru
      _
    %90 = vsyncpa [#allocation4], 1
    %91 = vsyncpa [#allocation5], 1

</llo_original>
